<compile_context>
chip_gen: v7x
topology: tpu7x:2x2x1
jax: 0.10.0
libtpu: 0.0.40
codegen_flags: <defaults>
</compile_context>

<pallas_src>
import jax
import jax.numpy as jnp
from jax.experimental import pallas as pl
from jax.experimental.pallas import tpu as pltpu


def _round_up(x, m):
    return ((x + m - 1) // m) * m


def _reward_kernel(state_ref, action_ref,
                   w1_ref, w2_ref, b12_ref,
                   w3_ref, b3_ref,
                   wo_ref, bo_ref,
                   out_ref):
    x = state_ref[...].astype(jnp.float32)            # (TB, nS)
    act = action_ref[...]                             # (TB, 1) int32
    tb = x.shape[0]
    na = w2_ref.shape[0]

    # one-hot(action): (TB, nA) via broadcasted-iota compare (pure VPU, no MXU)
    col = jax.lax.broadcasted_iota(jnp.int32, (tb, na), 1)
    oh = (col == act).astype(jnp.bfloat16)

    # fc1 / fc2: two independent MXU dots accumulating into one f32 tensor
    # (weights are zero-padded to the concat width -> identical to
    #  concat([fc1_pre, fc2_pre]) but without any lane concat / XLU work).
    h12 = jnp.dot(x.astype(jnp.bfloat16), w1_ref[...],
                  preferred_element_type=jnp.float32)
    h12 = h12 + jnp.dot(oh, w2_ref[...], preferred_element_type=jnp.float32)
    h12 = jnp.maximum(h12 + b12_ref[...], 0.0)        # == concat(relu(fc1), relu(fc2))

    # fc3 + relu
    h3 = jnp.dot(h12.astype(jnp.bfloat16), w3_ref[...],
                 preferred_element_type=jnp.float32) + b3_ref[...]
    h3 = jnp.maximum(h3, 0.0)

    # output head (no activation)
    out = jnp.dot(h3.astype(jnp.bfloat16), wo_ref[...],
                  preferred_element_type=jnp.float32) + bo_ref[...]
    out_ref[...] = out.astype(out_ref.dtype)


def reward_approximator_forward(state, action, params, *, tile_b=None):
    """state: (B, nS) float; action: (B,) int; params from init_params."""
    B, nS = state.shape
    nO = params["wo"].shape[1]

    # batch tile: big tile (amortize per-step overhead), multiple of 16
    if tile_b is None:
        tile_b = min(2048, _round_up(B, 16))
    tile_b = _round_up(tile_b, 16)
    Bp = _round_up(B, tile_b)

    state_p = state.astype(jnp.float32)
    action2d = action.reshape(B, 1).astype(jnp.int32)
    if Bp != B:
        state_p = jnp.pad(state_p, ((0, Bp - B), (0, 0)))
        action2d = jnp.pad(action2d, ((0, Bp - B), (0, 0)))

    grid = (Bp // tile_b,)

    def batch_spec(width):
        return pl.BlockSpec((tile_b, width), lambda i: (i, 0))

    def const_spec(arr):
        return pl.BlockSpec(arr.shape, lambda i: (0, 0))   # VMEM-resident

    out = pl.pallas_call(
        _reward_kernel,
        out_shape=jax.ShapeDtypeStruct((Bp, nO), jnp.float32),
        grid=grid,
        in_specs=[
            batch_spec(nS),              # state
            batch_spec(1),               # action
            const_spec(params["w1"]),
            const_spec(params["w2"]),
            const_spec(params["b12"]),
            const_spec(params["w3"]),
            const_spec(params["b3"]),
            const_spec(params["wo"]),
            const_spec(params["bo"]),
        ],
        out_specs=batch_spec(nO),
        compiler_params=pltpu.CompilerParams(
            dimension_semantics=("parallel",),
            vmem_limit_bytes=32 * 1024 * 1024,
        ),
    )(state_p, action2d,
      params["w1"], params["w2"], params["b12"],
      params["w3"], params["b3"],
      params["wo"], params["bo"])

    return out[:B] if Bp != B else out


def init_params(key, nS, nA, nO):
    """PyTorch-style uniform(+-1/sqrt(fan_in)) init.  Weights are stored
    transposed (in_features, out_features); fc1/fc2 weights are zero-padded to
    the concat width so the kernel can sum two dots instead of concatenating.
    Matmul weights are bf16 (MXU-native); biases stay float32."""
    h = nS // 2

    def linear(k, fan_in, fan_out):
        kw, kb = jax.random.split(k)
        bound = 1.0 / jnp.sqrt(float(fan_in))
        w = jax.random.uniform(kw, (fan_in, fan_out), jnp.float32, -bound, bound)
        b = jax.random.uniform(kb, (1, fan_out), jnp.float32, -bound, bound)
        return w, b

    k1, k2, k3, k4 = jax.random.split(key, 4)
    w1, b1 = linear(k1, nS, h)            # fc1: nS -> nS//2
    w2, b2 = linear(k2, nA, nA)           # fc2: nA -> nA
    w3, b3 = linear(k3, h + nA, h)        # fc3: nS//2 + nA -> nS//2
    wo, bo = linear(k4, h, nO)            # out: nS//2 -> nO

    # zero-pad to concat width: [x, onehot] @ block_diag(W1,W2) == x@W1p + oh@W2p
    w1p = jnp.zeros((nS, h + nA), jnp.float32).at[:, :h].set(w1)
    w2p = jnp.zeros((nA, h + nA), jnp.float32).at[:, h:].set(w2)
    b12 = jnp.concatenate([b1, b2], axis=1)

    return {
        "w1": w1p.astype(jnp.bfloat16),
        "w2": w2p.astype(jnp.bfloat16),
        "b12": b12,
        "w3": w3.astype(jnp.bfloat16), "b3": b3,
        "wo": wo.astype(jnp.bfloat16), "bo": bo,
    }


def reference_forward(state, action, params):
    """Pure-JAX f32 reference mirroring the PyTorch module (concat -> fc3)."""
    nA = params["w2"].shape[0]
    w1 = params["w1"].astype(jnp.float32)
    w2 = params["w2"].astype(jnp.float32)
    w3 = params["w3"].astype(jnp.float32)
    wo = params["wo"].astype(jnp.float32)

    oh = jax.nn.one_hot(action, nA, dtype=jnp.float32)
    # zero-padded w1/w2 make this identical to concat([relu(fc1), relu(fc2)])
    h12 = jax.nn.relu(state.astype(jnp.float32) @ w1 + oh @ w2 + params["b12"])
    h3 = jax.nn.relu(h12 @ w3 + params["b3"])
    return h3 @ wo + params["bo"]


if __name__ == "__main__":
    nS, nA, nO = 32, 4, 2

    key = jax.random.PRNGKey(0)
    kp, ks, ka, ks2, ka2 = jax.random.split(key, 5)
    params = init_params(kp, nS, nA, nO)

    # small single-tile batch
    B = 8
    state = jax.random.normal(ks, (B, nS), dtype=jnp.float32)
    action = jax.random.randint(ka, (B,), 0, nA, dtype=jnp.int32)
    out = jax.block_until_ready(reward_approximator_forward(state, action, params))
    ref = reference_forward(state, action, params)
    assert out.shape == (B, nO)
    assert jnp.allclose(out, ref, atol=2e-2, rtol=2e-2), "mismatch vs reference (B=8)"

    # multi-tile batch exercising the grid + batch-edge padding path
    B2 = 100
    state2 = jax.random.normal(ks2, (B2, nS), dtype=jnp.float32)
    action2 = jax.random.randint(ka2, (B2,), 0, nA, dtype=jnp.int32)
    out2 = jax.block_until_ready(
        reward_approximator_forward(state2, action2, params, tile_b=32))
    ref2 = reference_forward(state2, action2, params)
    assert out2.shape == (B2, nO)
    assert jnp.allclose(out2, ref2, atol=2e-2, rtol=2e-2), "mismatch vs reference (B=100)"

    print("KERNEL_OK")
</pallas_src>

<mosaic_0001>
module attributes {stable_mosaic.version = 11 : i64} {
  func.func @_reward_kernel(%arg0: i32, %arg1: memref<16x32xf32, #tpu.memory_space<vmem>>, %arg2: memref<16x1xi32, #tpu.memory_space<vmem>>, %arg3: memref<32x20xbf16, #tpu.memory_space<vmem>>, %arg4: memref<4x20xbf16, #tpu.memory_space<vmem>>, %arg5: memref<1x20xf32, #tpu.memory_space<vmem>>, %arg6: memref<20x16xbf16, #tpu.memory_space<vmem>>, %arg7: memref<1x16xf32, #tpu.memory_space<vmem>>, %arg8: memref<16x2xbf16, #tpu.memory_space<vmem>>, %arg9: memref<1x2xf32, #tpu.memory_space<vmem>>, %arg10: memref<16x2xf32, #tpu.memory_space<vmem>>) attributes {dimension_semantics = [#tpu.dimension_semantics<parallel>], iteration_bounds = array<i64: 1>, scalar_prefetch = 0 : i64, scratch_operands = 0 : i64, tpu.core_type = #tpu.core_type<tc>, window_params = [{transform_indices = @transform_0, window_bounds = array<i64: 16, 32>}, {transform_indices = @transform_1, window_bounds = array<i64: 16, 1>}, {pipeline_mode = #tpu.pipeline_mode<synchronous>, transform_indices = @transform_2, window_bounds = array<i64: 32, 20>}, {pipeline_mode = #tpu.pipeline_mode<synchronous>, transform_indices = @transform_3, window_bounds = array<i64: 4, 20>}, {pipeline_mode = #tpu.pipeline_mode<synchronous>, transform_indices = @transform_4, window_bounds = array<i64: 1, 20>}, {pipeline_mode = #tpu.pipeline_mode<synchronous>, transform_indices = @transform_5, window_bounds = array<i64: 20, 16>}, {pipeline_mode = #tpu.pipeline_mode<synchronous>, transform_indices = @transform_6, window_bounds = array<i64: 1, 16>}, {pipeline_mode = #tpu.pipeline_mode<synchronous>, transform_indices = @transform_7, window_bounds = array<i64: 16, 2>}, {pipeline_mode = #tpu.pipeline_mode<synchronous>, transform_indices = @transform_8, window_bounds = array<i64: 1, 2>}, {transform_indices = @transform_9, window_bounds = array<i64: 16, 2>}]} {
    %c0 = arith.constant 0 : index
    %c0_0 = arith.constant 0 : index
    %0 = vector.load %arg1[%c0, %c0_0] : memref<16x32xf32, #tpu.memory_space<vmem>>, vector<16x32xf32>
    %c0_1 = arith.constant 0 : index
    %c0_2 = arith.constant 0 : index
    %1 = vector.load %arg2[%c0_1, %c0_2] : memref<16x1xi32, #tpu.memory_space<vmem>>, vector<16x1xi32>
    %2 = tpu.iota {dimensions = array<i32: 1>} : vector<16x4xi32>
    %3 = vector.broadcast %1 : vector<16x1xi32> to vector<16x4xi32>
    %4 = arith.cmpi eq, %2, %3 : vector<16x4xi32>
    %5 = arith.extui %4 : vector<16x4xi1> to vector<16x4xi32>
    %6 = arith.sitofp %5 : vector<16x4xi32> to vector<16x4xf32>
    %7 = arith.truncf %6 : vector<16x4xf32> to vector<16x4xbf16>
    %8 = arith.truncf %0 : vector<16x32xf32> to vector<16x32xbf16>
    %c0_3 = arith.constant 0 : index
    %c0_4 = arith.constant 0 : index
    %9 = vector.load %arg3[%c0_3, %c0_4] : memref<32x20xbf16, #tpu.memory_space<vmem>>, vector<32x20xbf16>
    %cst = arith.constant dense<0.000000e+00> : vector<16x20xf32>
    %10 = tpu.matmul %8, %9, %cst {dimension_numbers = #tpu.dot_dimension_numbers<[1], [0], [0], [1], [0, 0, 1, 1], [], []>} : vector<16x32xbf16>, vector<32x20xbf16>, vector<16x20xf32> -> vector<16x20xf32>
    %c0_5 = arith.constant 0 : index
    %c0_6 = arith.constant 0 : index
    %11 = vector.load %arg4[%c0_5, %c0_6] : memref<4x20xbf16, #tpu.memory_space<vmem>>, vector<4x20xbf16>
    %cst_7 = arith.constant dense<0.000000e+00> : vector<16x20xf32>
    %12 = tpu.matmul %7, %11, %cst_7 {dimension_numbers = #tpu.dot_dimension_numbers<[1], [0], [0], [1], [0, 0, 1, 1], [], []>} : vector<16x4xbf16>, vector<4x20xbf16>, vector<16x20xf32> -> vector<16x20xf32>
    %13 = arith.addf %10, %12 : vector<16x20xf32>
    %c0_8 = arith.constant 0 : index
    %c0_9 = arith.constant 0 : index
    %14 = vector.load %arg5[%c0_8, %c0_9] : memref<1x20xf32, #tpu.memory_space<vmem>>, vector<1x20xf32>
    %15 = vector.broadcast %14 : vector<1x20xf32> to vector<16x20xf32>
    %16 = arith.addf %13, %15 : vector<16x20xf32>
    %cst_10 = arith.constant 0.000000e+00 : f32
    %17 = vector.broadcast %cst_10 : f32 to vector<16x20xf32>
    %18 = arith.maximumf %16, %17 : vector<16x20xf32>
    %19 = arith.truncf %18 : vector<16x20xf32> to vector<16x20xbf16>
    %c0_11 = arith.constant 0 : index
    %c0_12 = arith.constant 0 : index
    %20 = vector.load %arg6[%c0_11, %c0_12] : memref<20x16xbf16, #tpu.memory_space<vmem>>, vector<20x16xbf16>
    %cst_13 = arith.constant dense<0.000000e+00> : vector<16x16xf32>
    %21 = tpu.matmul %19, %20, %cst_13 {dimension_numbers = #tpu.dot_dimension_numbers<[1], [0], [0], [1], [0, 0, 1, 1], [], []>} : vector<16x20xbf16>, vector<20x16xbf16>, vector<16x16xf32> -> vector<16x16xf32>
    %c0_14 = arith.constant 0 : index
    %c0_15 = arith.constant 0 : index
    %22 = vector.load %arg7[%c0_14, %c0_15] : memref<1x16xf32, #tpu.memory_space<vmem>>, vector<1x16xf32>
    %23 = vector.broadcast %22 : vector<1x16xf32> to vector<16x16xf32>
    %24 = arith.addf %21, %23 : vector<16x16xf32>
    %cst_16 = arith.constant 0.000000e+00 : f32
    %25 = vector.broadcast %cst_16 : f32 to vector<16x16xf32>
    %26 = arith.maximumf %24, %25 : vector<16x16xf32>
    %27 = arith.truncf %26 : vector<16x16xf32> to vector<16x16xbf16>
    %c0_17 = arith.constant 0 : index
    %c0_18 = arith.constant 0 : index
    %28 = vector.load %arg8[%c0_17, %c0_18] : memref<16x2xbf16, #tpu.memory_space<vmem>>, vector<16x2xbf16>
    %cst_19 = arith.constant dense<0.000000e+00> : vector<16x2xf32>
    %29 = tpu.matmul %27, %28, %cst_19 {dimension_numbers = #tpu.dot_dimension_numbers<[1], [0], [0], [1], [0, 0, 1, 1], [], []>} : vector<16x16xbf16>, vector<16x2xbf16>, vector<16x2xf32> -> vector<16x2xf32>
    %c0_20 = arith.constant 0 : index
    %c0_21 = arith.constant 0 : index
    %30 = vector.load %arg9[%c0_20, %c0_21] : memref<1x2xf32, #tpu.memory_space<vmem>>, vector<1x2xf32>
    %31 = vector.broadcast %30 : vector<1x2xf32> to vector<16x2xf32>
    %32 = arith.addf %29, %31 : vector<16x2xf32>
    %c0_22 = arith.constant 0 : index
    %c0_23 = arith.constant 0 : index
    %33 = vector.load %arg10[%c0_22, %c0_23] : memref<16x2xf32, #tpu.memory_space<vmem>>, vector<16x2xf32>
    tpu.vector_store %arg10[%c0_22, %c0_23], %32 {strides = array<i32>} : memref<16x2xf32, #tpu.memory_space<vmem>>, vector<16x2xf32>,
    return
  }
  func.func @transform_0(%arg0: i32) -> (i32, i32) {
    %c0_i32 = arith.constant 0 : i32
    %c0_i32_0 = arith.constant 0 : i32
    return %arg0, %c0_i32 : i32, i32
  }
  func.func @transform_1(%arg0: i32) -> (i32, i32) {
    %c0_i32 = arith.constant 0 : i32
    %c0_i32_0 = arith.constant 0 : i32
    return %arg0, %c0_i32 : i32, i32
  }
  func.func @transform_2(%arg0: i32) -> (i32, i32) {
    %c0_i32 = arith.constant 0 : i32
    %c0_i32_0 = arith.constant 0 : i32
    %c0_i32_1 = arith.constant 0 : i32
    return %c0_i32, %c0_i32_0 : i32, i32
  }
  func.func @transform_3(%arg0: i32) -> (i32, i32) {
    %c0_i32 = arith.constant 0 : i32
    %c0_i32_0 = arith.constant 0 : i32
    %c0_i32_1 = arith.constant 0 : i32
    return %c0_i32, %c0_i32_0 : i32, i32
  }
  func.func @transform_4(%arg0: i32) -> (i32, i32) {
    %c0_i32 = arith.constant 0 : i32
    %c0_i32_0 = arith.constant 0 : i32
    %c0_i32_1 = arith.constant 0 : i32
    return %c0_i32, %c0_i32_0 : i32, i32
  }
  func.func @transform_5(%arg0: i32) -> (i32, i32) {
    %c0_i32 = arith.constant 0 : i32
    %c0_i32_0 = arith.constant 0 : i32
    %c0_i32_1 = arith.constant 0 : i32
    return %c0_i32, %c0_i32_0 : i32, i32
  }
  func.func @transform_6(%arg0: i32) -> (i32, i32) {
    %c0_i32 = arith.constant 0 : i32
    %c0_i32_0 = arith.constant 0 : i32
    %c0_i32_1 = arith.constant 0 : i32
    return %c0_i32, %c0_i32_0 : i32, i32
  }
  func.func @transform_7(%arg0: i32) -> (i32, i32) {
    %c0_i32 = arith.constant 0 : i32
    %c0_i32_0 = arith.constant 0 : i32
    %c0_i32_1 = arith.constant 0 : i32
    return %c0_i32, %c0_i32_0 : i32, i32
  }
  func.func @transform_8(%arg0: i32) -> (i32, i32) {
    %c0_i32 = arith.constant 0 : i32
    %c0_i32_0 = arith.constant 0 : i32
    %c0_i32_1 = arith.constant 0 : i32
    return %c0_i32, %c0_i32_0 : i32, i32
  }
  func.func @transform_9(%arg0: i32) -> (i32, i32) {
    %c0_i32 = arith.constant 0 : i32
    %c0_i32_0 = arith.constant 0 : i32
    return %arg0, %c0_i32 : i32, i32
  }
}

</mosaic_0001>

<llo_original>
// kernel: tpu_custom_call.1
$region0: #{tpu_custom_call.1}
  #allocation0 [shape = 'u32[]', space=smem, size = 0x4, offset = 0x4, fixed_abs, tag = 'smem constant byte address 0x4 - core index']
  #allocation1 [shape = 'u32[144,128]{1,0:T(1,128)}', space=vmem, size = 0x12000, scoped, tag = 'internal scratch']
  %s0 = inlined_call_operand.vmem [shape: f32[16,32], index: 0, kind: input, shape index: {}]
  %s1 = inlined_call_operand.vmem [shape: s32[16,1], index: 1, kind: input, shape index: {}]
  %s2 = inlined_call_operand.vmem [shape: bf16[32,20], index: 2, kind: input, shape index: {}]
  %s3 = inlined_call_operand.vmem [shape: bf16[4,20], index: 3, kind: input, shape index: {}]
  %s4 = inlined_call_operand.vmem [shape: f32[1,20], index: 4, kind: input, shape index: {}]
  %s5 = inlined_call_operand.vmem [shape: bf16[20,16], index: 5, kind: input, shape index: {}]
  %s6 = inlined_call_operand.vmem [shape: f32[1,16], index: 6, kind: input, shape index: {}]
  %s7 = inlined_call_operand.vmem [shape: bf16[16,2], index: 7, kind: input, shape index: {}]
  %s8 = inlined_call_operand.vmem [shape: f32[1,2], index: 8, kind: input, shape index: {}]
  %s9 = inlined_call_operand.vmem [shape: f32[16,2], index: 9, kind: output, shape index: {}]
  %s10 = sld [smem:[#allocation0]]
  $region46: #{tpu_custom_call.1} parent=0
    _
  %s12 = ssub.s32 1, %s10
  %s13 = scalar_select 0, %s12, %s10
  // Predicated region
  $region2: #{tpu_custom_call.1} parent=0 // pred_check
    _
  $region3: #{tpu_custom_call.1} parent=0 // pred_check_branch
    %15 = sbr.rel (0) target = $region5
  $region4: #{tpu_custom_call.1} parent=0 // pred_region
    _
  $region5: #{tpu_custom_call.1} parent=0 // pred_fallthru
    _
  // Predicated region
  $region6: #{tpu_custom_call.1} parent=0 // pred_check
    _
  $region7: #{tpu_custom_call.1} parent=0 // pred_check_branch
    %17 = sbr.rel (0) target = $region9
  $region8: #{tpu_custom_call.1} parent=0 // pred_region
    _
  $region9: #{tpu_custom_call.1} parent=0 // pred_fallthru
    _
  // Predicated region
  $region10: #{tpu_custom_call.1} parent=0 // pred_check
    _
  $region11: #{tpu_custom_call.1} parent=0 // pred_check_branch
    %19 = sbr.rel (0) target = $region13
  $region12: #{tpu_custom_call.1} parent=0 // pred_region
    _
  $region13: #{tpu_custom_call.1} parent=0 // pred_fallthru
    _
  // Predicated region
  $region14: #{tpu_custom_call.1} parent=0 // pred_check
    _
  $region15: #{tpu_custom_call.1} parent=0 // pred_check_branch
    %21 = sbr.rel (0) target = $region17
  $region16: #{tpu_custom_call.1} parent=0 // pred_region
    _
  $region17: #{tpu_custom_call.1} parent=0 // pred_fallthru
    _
  // Predicated region
  $region18: #{tpu_custom_call.1} parent=0 // pred_check
    _
  $region19: #{tpu_custom_call.1} parent=0 // pred_check_branch
    %23 = sbr.rel (0) target = $region21
  $region20: #{tpu_custom_call.1} parent=0 // pred_region
    _
  $region21: #{tpu_custom_call.1} parent=0 // pred_fallthru
    _
  // Predicated region
  $region22: #{tpu_custom_call.1} parent=0 // pred_check
    _
  $region23: #{tpu_custom_call.1} parent=0 // pred_check_branch
    %25 = sbr.rel (0) target = $region25
  $region24: #{tpu_custom_call.1} parent=0 // pred_region
    _
  $region25: #{tpu_custom_call.1} parent=0 // pred_fallthru
    _
  // Predicated region
  $region26: #{tpu_custom_call.1} parent=0 // pred_check
    _
  $region27: #{tpu_custom_call.1} parent=0 // pred_check_branch
    %27 = sbr.rel (0) target = $region29
  $region28: #{tpu_custom_call.1} parent=0 // pred_region
    _
  $region29: #{tpu_custom_call.1} parent=0 // pred_fallthru
    _
  // Predicated region
  $region30: #{tpu_custom_call.1} parent=0 // pred_check
    _
  $region31: #{tpu_custom_call.1} parent=0 // pred_check_branch
    %29 = sbr.rel (0) target = $region33
  $region32: #{tpu_custom_call.1} parent=0 // pred_region
    _
  $region33: #{tpu_custom_call.1} parent=0 // pred_fallthru
    _
  // Predicated region
  $region34: #{tpu_custom_call.1} parent=0 // pred_check
    _
  $region35: #{tpu_custom_call.1} parent=0 // pred_check_branch
    %31 = sbr.rel (0) target = $region37
  $region36: #{tpu_custom_call.1} parent=0 // pred_region
    _
  $region37: #{tpu_custom_call.1} parent=0 // pred_fallthru
    _
  %v33 = vld [vmem:[%s0] sm:$0xff]
  %v34 = vld [vmem:[%s0 + $0x8] sm:$0xff]
  %v35 = vld [vmem:[%s1] sm:$0xff]
  %v36 = vld [vmem:[%s1 + $0x8] sm:$0xff]
  %v37 = vlaneseq
  %v38 = vand.u32 %v37, 127
  %39 = vset.pattern.permute.xlu0 0
  %40 = vperm.xlu0 %39, %v35
  %v41 = vpop.permute.xlu0 %40
  %42 = vset.pattern.permute.xlu0 0
  %43 = vperm.xlu0 %42, %v36
  %v44 = vpop.permute.xlu0 %43
  %vm45 = vcmp.eq.s32.totalorder %v38, %v41
  %vm46 = vcmp.eq.s32.totalorder %v38, %v44
  %v47 = vsel %vm45, 1, 0
  %v48 = vsel %vm46, 1, 0
  %v49 = vcvt.s32.f32 %v47
  %v50 = vcvt.s32.f32 %v48
  %v51 = vpack.c.bf16 %v50, %v49
  %v52 = vpack.c.bf16 %v34, %v33
  %v53 = vld [vmem:[%s2] sm:$0xf]
  %v54 = vld [vmem:[%s2 + $0x4] sm:$0xf]
  %v55 = vld [vmem:[%s2 + $0x8] sm:$0xf]
  %v56 = vld [vmem:[%s2 + $0xc] sm:$0xf]
  %v57 = vld [vmem:[%s3] sm:$0x3]
  %vm58 = vcmask 31744
  %v60 = vsel %vm58, %v51, 0
  %vm62 = vcmask 1041408
  %v64 = vsel %vm62, %v57, 0
  %66 = vmatprep.subr.bf16.mxu0 0
  %67 = vmatpush1.bf16.msra.mxu0 %v64
  %68 = vmatprep.subr.bf16.mxu0 0
  %69 = vmatpush1.bf16.msra.mxu0 0
  %70 = vmatprep.subr.bf16.mxu0 0
  %71 = vmatpush1.bf16.msra.mxu0 0
  %72 = vmatprep.subr.bf16.mxu0 0
  %73 = vmatpush1.bf16.msra.mxu0 0
  %74 = vmatprep.subr.bf16.mxu0 0
  %75 = vmatpush1.bf16.msra.mxu0 0
  %76 = vmatprep.subr.bf16.mxu0 0
  %77 = vmatpush1.bf16.msra.mxu0 0
  %78 = vmatprep.subr.bf16.mxu0 0
  %79 = vmatpush1.bf16.msra.mxu0 0
  %80 = vmatprep.subr.bf16.mxu0 0
  %81 = vmatpush1.bf16.msra.mxu0 0
  %82 = vmatprep.subr.bf16.mxu0 0
  %83 = vmatpush1.bf16.msra.mxu0 0
  %84 = vmatprep.subr.bf16.mxu0 0
  %85 = vmatpush1.bf16.msra.mxu0 0
  %86 = vmatprep.subr.bf16.mxu0 0
  %87 = vmatpush1.bf16.msra.mxu0 0
  %88 = vmatprep.subr.bf16.mxu0 0
  %89 = vmatpush1.bf16.msra.mxu0 0
  %90 = vmatprep.subr.bf16.mxu0 0
  %91 = vmatpush1.bf16.msra.mxu0 0
  %92 = vmatprep.subr.bf16.mxu0 0
  %93 = vmatpush1.bf16.msra.mxu0 0
  %94 = vmatprep.subr.bf16.mxu0 0
  %95 = vmatpush1.bf16.msra.mxu0 0
  %96 = vmatprep.subr.bf16.mxu0 0
  %97 = vmatpush1.bf16.msra.mxu0 0
  %98 = vmatprep.mubr.bf16.mxu0 0
  %99 = vmatmul.mubr.bf16.gmra.mrb[0].mxu0 %v60
  %v100 = vpop.f32.mrb[0].mxu0
  %v101 = vadd.f32 0.0, %v100
  %v102 = vpop.f32.mrb[0].mxu0
  %v103 = vpop.f32.mrb[0].mxu0
  %v104 = vadd.f32 0.0, %v103
  %v105 = vpop.f32.mrb[0].mxu0
  %106 = vdwg.mxu0
  %v111 = vunpack.c.l.b16 %v53
  %v112 = vunpack.c.l.b16 %v54
  %v113 = vunpack.c.l.b16 %v55
  %v114 = vunpack.c.l.b16 %v56
  %v115 = vpack.c.b16 %v112, %v111
  %v116 = vpack.c.b16 %v114, %v113
  %vm119 = vcmask 261120
  %v121 = vsel %vm119, %v52, 0
  %123 = vmatprep.subr.bf16.mxu0 0
  %124 = vmatpush1.bf16.msra.mxu0 %v115
  %125 = vmatprep.subr.bf16.mxu0 0
  %126 = vmatpush1.bf16.msra.mxu0 %v116
  %127 = vmatprep.subr.bf16.mxu0 0
  %128 = vmatpush1.bf16.msra.mxu0 0
  %129 = vmatprep.subr.bf16.mxu0 0
  %130 = vmatpush1.bf16.msra.mxu0 0
  %131 = vmatprep.subr.bf16.mxu0 0
  %132 = vmatpush1.bf16.msra.mxu0 0
  %133 = vmatprep.subr.bf16.mxu0 0
  %134 = vmatpush1.bf16.msra.mxu0 0
  %135 = vmatprep.subr.bf16.mxu0 0
  %136 = vmatpush1.bf16.msra.mxu0 0
  %137 = vmatprep.subr.bf16.mxu0 0
  %138 = vmatpush1.bf16.msra.mxu0 0
  %139 = vmatprep.subr.bf16.mxu0 0
  %140 = vmatpush1.bf16.msra.mxu0 0
  %141 = vmatprep.subr.bf16.mxu0 0
  %142 = vmatpush1.bf16.msra.mxu0 0
  %143 = vmatprep.subr.bf16.mxu0 0
  %144 = vmatpush1.bf16.msra.mxu0 0
  %145 = vmatprep.subr.bf16.mxu0 0
  %146 = vmatpush1.bf16.msra.mxu0 0
  %147 = vmatprep.subr.bf16.mxu0 0
  %148 = vmatpush1.bf16.msra.mxu0 0
  %149 = vmatprep.subr.bf16.mxu0 0
  %150 = vmatpush1.bf16.msra.mxu0 0
  %151 = vmatprep.subr.bf16.mxu0 0
  %152 = vmatpush1.bf16.msra.mxu0 0
  %153 = vmatprep.subr.bf16.mxu0 0
  %154 = vmatpush1.bf16.msra.mxu0 0
  %155 = vmatprep.mubr.bf16.mxu0 0
  %156 = vmatmul.mubr.bf16.gmra.mrb[0].mxu0 %v121
  %v157 = vpop.f32.mrb[0].mxu0
  %v158 = vadd.f32 %v101, %v157
  %v159 = vpop.f32.mrb[0].mxu0
  %v160 = vpop.f32.mrb[0].mxu0
  %v161 = vadd.f32 %v104, %v160
  %v162 = vpop.f32.mrb[0].mxu0
  %163 = vdwg.mxu0
  %v164 = vld [vmem:[%s4] sm:$0x1]
  %v166 = vlaneseq
  %v167 = vshrl.u32 %v166, 7
  %v168 = vsub.s32 0, %v167
  %v169 = vrot.slane %v164, %v168
  %v171 = vadd.f32 %v158, %v169
  %v172 = vadd.f32 %v161, %v169
  %v173 = vmax.f32 %v171, 0.0
  %v174 = vmax.f32 %v172, 0.0
  %v175 = vpack.c.bf16 %v174, %v173
  %v176 = vld [vmem:[%s5] sm:$0xf]
  %v177 = vld [vmem:[%s5 + $0x4] sm:$0xf]
  %v178 = vld [vmem:[%s5 + $0x8] sm:$0x3]
  %v179 = vld [vmem:[%s6] sm:$0x1]
  %v181 = vlaneseq
  %v182 = vshrl.u32 %v181, 7
  %v183 = vsub.s32 0, %v182
  %v184 = vrot.slane %v179, %v183
  %v189 = vunpack.c.l.b16 %v176
  %v190 = vunpack.c.l.b16 %v177
  %v191 = vunpack.c.l.b16 %v178
  %v192 = vpack.c.b16 %v190, %v189
  %v193 = vpack.c.b16 %v191, %v191
  %vm195 = vcmask 162816
  %v197 = vsel %vm195, %v175, 0
  %v200 = vsel %vm62, %v193, 0
  %202 = vmatprep.subr.bf16.mxu0 0
  %203 = vmatpush1.bf16.msra.mxu0 %v192
  %204 = vmatprep.subr.bf16.mxu0 0
  %205 = vmatpush1.bf16.msra.mxu0 %v200
  %206 = vmatprep.subr.bf16.mxu0 0
  %207 = vmatpush1.bf16.msra.mxu0 0
  %208 = vmatprep.subr.bf16.mxu0 0
  %209 = vmatpush1.bf16.msra.mxu0 0
  %210 = vmatprep.subr.bf16.mxu0 0
  %211 = vmatpush1.bf16.msra.mxu0 0
  %212 = vmatprep.subr.bf16.mxu0 0
  %213 = vmatpush1.bf16.msra.mxu0 0
  %214 = vmatprep.subr.bf16.mxu0 0
  %215 = vmatpush1.bf16.msra.mxu0 0
  %216 = vmatprep.subr.bf16.mxu0 0
  %217 = vmatpush1.bf16.msra.mxu0 0
  %218 = vmatprep.subr.bf16.mxu0 0
  %219 = vmatpush1.bf16.msra.mxu0 0
  %220 = vmatprep.subr.bf16.mxu0 0
  %221 = vmatpush1.bf16.msra.mxu0 0
  %222 = vmatprep.subr.bf16.mxu0 0
  %223 = vmatpush1.bf16.msra.mxu0 0
  %224 = vmatprep.subr.bf16.mxu0 0
  %225 = vmatpush1.bf16.msra.mxu0 0
  %226 = vmatprep.subr.bf16.mxu0 0
  %227 = vmatpush1.bf16.msra.mxu0 0
  %228 = vmatprep.subr.bf16.mxu0 0
  %229 = vmatpush1.bf16.msra.mxu0 0
  %230 = vmatprep.subr.bf16.mxu0 0
  %231 = vmatpush1.bf16.msra.mxu0 0
  %232 = vmatprep.subr.bf16.mxu0 0
  %233 = vmatpush1.bf16.msra.mxu0 0
  %234 = vmatprep.mubr.bf16.mxu0 0
  %235 = vmatmul.mubr.bf16.gmra.mrb[0].mxu0 %v197
  %v236 = vpop.f32.mrb[0].mxu0
  %v237 = vadd.f32 %v184, %v236
  %v238 = vpop.f32.mrb[0].mxu0
  %v239 = vpop.f32.mrb[0].mxu0
  %v240 = vadd.f32 %v184, %v239
  %v241 = vpop.f32.mrb[0].mxu0
  %242 = vdwg.mxu0
  %v243 = vmax.f32 %v237, 0.0
  %v244 = vmax.f32 %v240, 0.0
  %v245 = vpack.c.bf16 %v244, %v243
  %v246 = vld [vmem:[%s7] sm:$0xf]
  %v247 = vld [vmem:[%s7 + $0x4] sm:$0xf]
  %v248 = vld [vmem:[%s8] sm:$0x1]
  %v250 = vlaneseq
  %v251 = vshrl.u32 %v250, 7
  %v252 = vsub.s32 0, %v251
  %v253 = vrot.slane %v248, %v252
  %v257 = vunpack.c.l.b16 %v246
  %v258 = vunpack.c.l.b16 %v247
  %v259 = vpack.c.b16 %v258, %v257
  %vm261 = vcmask 130048
  %v263 = vsel %vm261, %v245, 0
  %265 = vmatprep.subr.bf16.mxu0 0
  %266 = vmatpush1.bf16.msra.mxu0 %v259
  %267 = vmatprep.subr.bf16.mxu0 0
  %268 = vmatpush1.bf16.msra.mxu0 0
  %269 = vmatprep.subr.bf16.mxu0 0
  %270 = vmatpush1.bf16.msra.mxu0 0
  %271 = vmatprep.subr.bf16.mxu0 0
  %272 = vmatpush1.bf16.msra.mxu0 0
  %273 = vmatprep.subr.bf16.mxu0 0
  %274 = vmatpush1.bf16.msra.mxu0 0
  %275 = vmatprep.subr.bf16.mxu0 0
  %276 = vmatpush1.bf16.msra.mxu0 0
  %277 = vmatprep.subr.bf16.mxu0 0
  %278 = vmatpush1.bf16.msra.mxu0 0
  %279 = vmatprep.subr.bf16.mxu0 0
  %280 = vmatpush1.bf16.msra.mxu0 0
  %281 = vmatprep.subr.bf16.mxu0 0
  %282 = vmatpush1.bf16.msra.mxu0 0
  %283 = vmatprep.subr.bf16.mxu0 0
  %284 = vmatpush1.bf16.msra.mxu0 0
  %285 = vmatprep.subr.bf16.mxu0 0
  %286 = vmatpush1.bf16.msra.mxu0 0
  %287 = vmatprep.subr.bf16.mxu0 0
  %288 = vmatpush1.bf16.msra.mxu0 0
  %289 = vmatprep.subr.bf16.mxu0 0
  %290 = vmatpush1.bf16.msra.mxu0 0
  %291 = vmatprep.subr.bf16.mxu0 0
  %292 = vmatpush1.bf16.msra.mxu0 0
  %293 = vmatprep.subr.bf16.mxu0 0
  %294 = vmatpush1.bf16.msra.mxu0 0
  %295 = vmatprep.subr.bf16.mxu0 0
  %296 = vmatpush1.bf16.msra.mxu0 0
  %297 = vmatprep.mubr.bf16.mxu0 0
  %298 = vmatmul.mubr.bf16.gmra.mrb[0].mxu0 %v263
  %v299 = vpop.f32.mrb[0].mxu0
  %v300 = vadd.f32 %v253, %v299
  %v301 = vpop.f32.mrb[0].mxu0
  %v302 = vpop.f32.mrb[0].mxu0
  %v303 = vadd.f32 %v253, %v302
  %v304 = vpop.f32.mrb[0].mxu0
  %305 = vdwg.mxu0
  %vm306 = vcmask 15360
  %307 = vst.msk [vmem:[%s9] sm:$0xff] %vm306, %v300
  %308 = vst.msk [vmem:[%s9 + $0x8] sm:$0xff] %vm306, %v303
  // Predicated region
  $region38: #{tpu_custom_call.1} parent=0 // pred_check
    _
  $region39: #{tpu_custom_call.1} parent=0 // pred_check_branch
    %310 = sbr.rel (0) target = $region41
  $region40: #{tpu_custom_call.1} parent=0 // pred_region
    _
  $region41: #{tpu_custom_call.1} parent=0 // pred_fallthru
    _
  // Predicated region
  $region42: #{tpu_custom_call.1} parent=0 // pred_check
    _
  $region43: #{tpu_custom_call.1} parent=0 // pred_check_branch
    %312 = sbr.rel (0) target = $region45
  $region44: #{tpu_custom_call.1} parent=0 // pred_region
    _
  $region45: #{tpu_custom_call.1} parent=0 // pred_fallthru
    _

</llo_original>
